<compile_context>
chip_gen: v6e
topology: v6e:2x2x1
jax: 0.10.0
libtpu: 0.0.40
codegen_flags: <defaults>
</compile_context>

<pallas_src>
import jax
import jax.numpy as jnp
from jax.experimental import pallas as pl
from jax.experimental.pallas import tpu as pltpu

_LANE = 128
_SUB = 8


def adain2d_kernel(g_ref, b_ref, x_ref, o_ref):
    # g_ref / b_ref: (TM, 1) f32 per-row affine params (gamma already has +1).
    # x_ref / o_ref: (TM, TN) spatial tile.  FMA in f32 (free slack: the kernel
    # is HBM-bound), cast only at the store.
    x = x_ref[...].astype(jnp.float32)
    o_ref[...] = (g_ref[...] * x + b_ref[...]).astype(o_ref.dtype)


def _vmem_budget_bytes():
    """~70% of this generation's physical VMEM (64 MiB v7x, 128 MiB v5e/v6e)."""
    try:
        cap = int(pltpu.get_tpu_info().vmem_capacity_bytes)
    except Exception:
        cap = 64 << 20  # conservative (v7x-sized) fallback
    return int(cap * 0.7)


def _pick_tiles(rows, hw, itemsize, budget):
    """Pick (TM, TN): TM multiple of 8 (sublanes), TN multiple of 128 (lanes).

    Targets ~2 MiB per x/out block while keeping 2x(in) + 2x(out) double
    buffers well inside `budget`.  No divisibility requirement on rows/hw:
    the grid uses cdiv and tail blocks are masked.
    """
    hw_ceil = -(-hw // _LANE) * _LANE
    rows_ceil = -(-rows // _SUB) * _SUB
    blk_target = max(_SUB * _LANE * itemsize, min(2 << 20, budget // 6))
    # Lane tile first (the big lever): as wide as the image, capped at 2048.
    tn = min(hw_ceil, 2048)
    tn = max(_LANE, min(tn, (blk_target // (_SUB * itemsize)) // _LANE * _LANE))
    # Sublane tile second: fill the block budget with rows.
    tm = (blk_target // (tn * itemsize)) // _SUB * _SUB
    tm = max(_SUB, min(rows_ceil, tm, 1024))
    return tm, tn


def adain2d(x, s, weight, bias):
    """x: (B, C, H, W), s: (B, S), weight: (2C, S), bias: (2C,) -> (B, C, H, W)."""
    B, C, H, W = x.shape
    HW = H * W
    rows = B * C

    # --- style FC in the wrapper (tiny; keeps the kernel pure load-FMA-store) ---
    h = jnp.dot(s.astype(jnp.float32), weight.T.astype(jnp.float32),
                preferred_element_type=jnp.float32) + bias.astype(jnp.float32)
    gamma1 = (1.0 + h[:, :C]).reshape(rows, 1)   # f32, includes the +1
    beta = h[:, C:].reshape(rows, 1)             # f32

    # --- stream x as a dense (B*C, HW) slab; no pad, no trailing slice ---
    x2 = x.reshape(rows, HW)

    itemsize = jnp.dtype(x.dtype).itemsize
    budget = _vmem_budget_bytes()
    tm, tn = _pick_tiles(rows, HW, itemsize, budget)
    blk_bytes = tm * tn * itemsize
    vmem_limit = int(min(budget, max(32 << 20, 8 * blk_bytes)))

    out2 = pl.pallas_call(
        adain2d_kernel,
        out_shape=jax.ShapeDtypeStruct((rows, HW), x.dtype),
        grid_spec=pltpu.PrefetchScalarGridSpec(
            num_scalar_prefetch=0,
            grid=(pl.cdiv(rows, tm), pl.cdiv(HW, tn)),
            in_specs=[
                pl.BlockSpec((tm, 1), lambda i, j: (i, 0)),    # gamma1 (resident over j)
                pl.BlockSpec((tm, 1), lambda i, j: (i, 0)),    # beta   (resident over j)
                pl.BlockSpec((tm, tn), lambda i, j: (i, j)),   # x tile
            ],
            out_specs=pl.BlockSpec((tm, tn), lambda i, j: (i, j)),
        ),
        compiler_params=pltpu.CompilerParams(
            dimension_semantics=("parallel", "parallel"),
            vmem_limit_bytes=vmem_limit,
        ),
    )(gamma1, beta, x2)

    return out2.reshape(B, C, H, W)


if __name__ == "__main__":
    key = jax.random.PRNGKey(0)
    B, C, H, W = 2, 4, 16, 16
    style_dim = 8

    k1, k2, k3, k4 = jax.random.split(key, 4)
    x = jax.random.normal(k1, (B, C, H, W), dtype=jnp.float32)
    s = jax.random.normal(k2, (B, style_dim), dtype=jnp.float32)

    # Deterministic init mirroring nn.Linear(style_dim, 2*C):
    # weight: (2C, style_dim), bias: (2C,), U(-1/sqrt(fan_in), 1/sqrt(fan_in))
    bound = 1.0 / (style_dim ** 0.5)
    weight = jax.random.uniform(k3, (2 * C, style_dim),
                                minval=-bound, maxval=bound, dtype=jnp.float32)
    bias = jax.random.uniform(k4, (2 * C,),
                              minval=-bound, maxval=bound, dtype=jnp.float32)

    out = adain2d(x, s, weight, bias)
    out = jax.block_until_ready(out)

    # Pure-JAX reference (identical to the PyTorch forward)
    h = s @ weight.T + bias
    gamma = h[:, :C].reshape(B, C, 1, 1)
    beta = h[:, C:].reshape(B, C, 1, 1)
    ref = (1.0 + gamma) * x + beta
    assert out.shape == (B, C, H, W)
    assert jnp.allclose(out, ref, atol=1e-5, rtol=1e-5)

    print("KERNEL_OK")
</pallas_src>

<mosaic_0001>
module attributes {stable_mosaic.version = 11 : i64} {
  func.func @adain2d_kernel(%arg0: i32, %arg1: i32, %arg2: memref<8x1xf32, #tpu.memory_space<vmem>>, %arg3: memref<8x1xf32, #tpu.memory_space<vmem>>, %arg4: memref<8x256xf32, #tpu.memory_space<vmem>>, %arg5: memref<8x256xf32, #tpu.memory_space<vmem>>) attributes {dimension_semantics = [#tpu.dimension_semantics<parallel>, #tpu.dimension_semantics<parallel>], iteration_bounds = array<i64: 1, 1>, scalar_prefetch = 0 : i64, scratch_operands = 0 : i64, tpu.core_type = #tpu.core_type<tc>, window_params = [{transform_indices = @transform_0, window_bounds = array<i64: 8, 1>}, {transform_indices = @transform_1, window_bounds = array<i64: 8, 1>}, {transform_indices = @transform_2, window_bounds = array<i64: 8, 256>}, {transform_indices = @transform_3, window_bounds = array<i64: 8, 256>}]} {
    %c0 = arith.constant 0 : index
    %c0_0 = arith.constant 0 : index
    %0 = vector.load %arg4[%c0, %c0_0] : memref<8x256xf32, #tpu.memory_space<vmem>>, vector<8x256xf32>
    %c0_1 = arith.constant 0 : index
    %c0_2 = arith.constant 0 : index
    %1 = vector.load %arg2[%c0_1, %c0_2] : memref<8x1xf32, #tpu.memory_space<vmem>>, vector<8x1xf32>
    %2 = vector.broadcast %1 : vector<8x1xf32> to vector<8x256xf32>
    %3 = arith.mulf %2, %0 : vector<8x256xf32>
    %c0_3 = arith.constant 0 : index
    %c0_4 = arith.constant 0 : index
    %4 = vector.load %arg3[%c0_3, %c0_4] : memref<8x1xf32, #tpu.memory_space<vmem>>, vector<8x1xf32>
    %5 = vector.broadcast %4 : vector<8x1xf32> to vector<8x256xf32>
    %6 = arith.addf %3, %5 : vector<8x256xf32>
    %c0_5 = arith.constant 0 : index
    %c0_6 = arith.constant 0 : index
    %7 = vector.load %arg5[%c0_5, %c0_6] : memref<8x256xf32, #tpu.memory_space<vmem>>, vector<8x256xf32>
    tpu.vector_store %arg5[%c0_5, %c0_6], %6 {strides = array<i32>} : memref<8x256xf32, #tpu.memory_space<vmem>>, vector<8x256xf32>,
    return
  }
  func.func @transform_0(%arg0: i32, %arg1: i32) -> (i32, i32) {
    %c0_i32 = arith.constant 0 : i32
    %c0_i32_0 = arith.constant 0 : i32
    return %arg0, %c0_i32 : i32, i32
  }
  func.func @transform_1(%arg0: i32, %arg1: i32) -> (i32, i32) {
    %c0_i32 = arith.constant 0 : i32
    %c0_i32_0 = arith.constant 0 : i32
    return %arg0, %c0_i32 : i32, i32
  }
  func.func @transform_2(%arg0: i32, %arg1: i32) -> (i32, i32) {
    %c0_i32 = arith.constant 0 : i32
    return %arg0, %arg1 : i32, i32
  }
  func.func @transform_3(%arg0: i32, %arg1: i32) -> (i32, i32) {
    %c0_i32 = arith.constant 0 : i32
    return %arg0, %arg1 : i32, i32
  }
}

</mosaic_0001>

<llo_original>
// kernel: tpu_custom_call.1
$region0: #{tpu_custom_call.1}
  #allocation0 [shape = 'u32[]', space=smem, size = 0x4, offset = 0x4, fixed_abs, tag = 'smem constant byte address 0x4 - core index']
  #allocation1 [shape = 'u32[144,128]{1,0:T(1,128)}', space=vmem, size = 0x12000, scoped, tag = 'internal scratch']
  %s0 = inlined_call_operand.vmem [shape: f32[8,1], index: 0, kind: input, shape index: {}]
  %s1 = inlined_call_operand.vmem [shape: f32[8,1], index: 1, kind: input, shape index: {}]
  %s2 = inlined_call_operand.vmem [shape: f32[8,256], index: 2, kind: input, shape index: {}]
  %s3 = inlined_call_operand.hbm [shape: f32[8,256], index: 3, kind: output, shape index: {}]
  %s4 = sld [smem:[#allocation0]]
  $region22: #{tpu_custom_call.1} parent=0
    _
  %s6 = ssub.s32 1, %s4
  %s7 = scalar_select 0, %s6, %s4
  $region1: #{tpu_custom_call.1} parent=0
    #allocation2 [shape = 'u8[8192]{0}', space=vmem, size = 0x2000, scoped, tag = 'output window, operand 0, single buffered']
    #allocation3 [shape = 's32[1]{0}', space=sflag, size = 0x4, scoped, tag = 'scoped memory for tpu_custom_call.1']
    %8 = vsyncpa [#allocation3], 0
    // Predicated region
    $region2: #{tpu_custom_call.1} parent=1 // pred_check
      _
    $region3: #{tpu_custom_call.1} parent=1 // pred_check_branch
      %10 = sbr.rel (0) target = $region5
    $region4: #{tpu_custom_call.1} parent=1 // pred_region
      _
    $region5: #{tpu_custom_call.1} parent=1 // pred_fallthru
      _
    // Predicated region
    $region6: #{tpu_custom_call.1} parent=1 // pred_check
      _
    $region7: #{tpu_custom_call.1} parent=1 // pred_check_branch
      %12 = sbr.rel (0) target = $region9
    $region8: #{tpu_custom_call.1} parent=1 // pred_region
      _
    $region9: #{tpu_custom_call.1} parent=1 // pred_fallthru
      _
    // Predicated region
    $region10: #{tpu_custom_call.1} parent=1 // pred_check
      _
    $region11: #{tpu_custom_call.1} parent=1 // pred_check_branch
      %14 = sbr.rel (0) target = $region13
    $region12: #{tpu_custom_call.1} parent=1 // pred_region
      _
    $region13: #{tpu_custom_call.1} parent=1 // pred_fallthru
      _
    %v15 = vld [vmem:[%s2] sm:$0xff]
    %v16 = vld [vmem:[%s2 + $0x8] sm:$0xff]
    %v17 = vld [vmem:[%s0] sm:$0xff]
    %19 = vset.pattern.permute.xlu0 0
    %20 = vperm.xlu0 %19, %v17
    %v21 = vpop.permute.xlu0 %20
    %v23 = vmul.f32 %v21, %v15
    %v24 = vmul.f32 %v21, %v16
    %v25 = vld [vmem:[%s1] sm:$0xff]
    %27 = vset.pattern.permute.xlu0 0
    %28 = vperm.xlu0 %27, %v25
    %v29 = vpop.permute.xlu0 %28
    %v31 = vadd.f32 %v23, %v29
    %v32 = vadd.f32 %v24, %v29
    %33 = vst [vmem:[#allocation2] sm:$0xff] %v31
    %34 = vst [vmem:[#allocation2 + $0x8] sm:$0xff] %v32
    // Predicated region
    $region14: #{tpu_custom_call.1} parent=1 // pred_check
      _
    $region15: #{tpu_custom_call.1} parent=1 // pred_check_branch
      %36 = sbr.rel (0) target = $region17
    $region16: #{tpu_custom_call.1} parent=1 // pred_region
      %s38 = ssub.s32 256, 256
      %39 = vsyncadd [#allocation3], %s38
      %s41 = sshll.u32 [#allocation2], 4
      %s42 = int_to_ptr.vmem [resolvable:$true] %s41
      %44 = dma.vmem_to_hbm [thread:$0]  %s42, 256, %s3, [#allocation3]
    $region17: #{tpu_custom_call.1} parent=1 // pred_fallthru
      _
    // Predicated region
    $region18: #{tpu_custom_call.1} parent=1 // pred_check
      _
    $region19: #{tpu_custom_call.1} parent=1 // pred_check_branch
      %46 = sbr.rel (0) target = $region21
    $region20: #{tpu_custom_call.1} parent=1 // pred_region
      %47 = dma.done [#allocation3], 256
    $region21: #{tpu_custom_call.1} parent=1 // pred_fallthru
      _
    %48 = vsyncpa [#allocation3], 1

</llo_original>
